<compile_context>
chip_gen: v6e
topology: v6e:2x2x1
jax: 0.10.0
libtpu: 0.0.40
codegen_flags: <defaults>
</compile_context>

<pallas_src>
import functools

import jax
import jax.numpy as jnp
from jax import lax
from jax.experimental import pallas as pl
from jax.experimental.pallas import tpu as pltpu

LANES = 128
_TWO_PI = 6.283185307179586

# murmur3 / golden-ratio constants written as int32 (two's complement) values.
_GOLDEN = -1640531527   # 0x9E3779B9
_C1 = -2048144789       # 0x85EBCA6B
_C2 = -1028477387       # 0xC2B2AE35


def _srl(h, k):
    """Logical right shift on int32 (arithmetic shift + mask of sign bits)."""
    return (h >> k) & jnp.int32((1 << (32 - k)) - 1)


def _fmix32(h):
    """murmur3 32-bit finalizer: bijective, good avalanche."""
    h = h ^ _srl(h, 16)
    h = h * jnp.int32(_C1)
    h = h ^ _srl(h, 13)
    h = h * jnp.int32(_C2)
    h = h ^ _srl(h, 16)
    return h


def _noise_kernel(seed_ref, x_ref, o_ref, *, scale):
    br, lanes = x_ref.shape

    # Global flat element index (independent of the tiling); int32 is fine for
    # tensors up to 2^31 elements.
    row = lax.broadcasted_iota(jnp.int32, (br, lanes), 0)
    lane = lax.broadcasted_iota(jnp.int32, (br, lanes), 1)
    idx = (pl.program_id(0) * br + row) * lanes + lane

    # Counter-based RNG: Weyl sequence keyed by the seed, then murmur3 fmix.
    h = _fmix32(idx * jnp.int32(_GOLDEN) + seed_ref[0])

    # One 32-bit draw -> two 16-bit uniforms (ample resolution for the noise).
    hi = _srl(h, 16)                  # [0, 65536)
    lo = h & jnp.int32(0xFFFF)        # [0, 65536)
    inv = jnp.float32(1.0 / 65536.0)
    u1 = (hi.astype(jnp.float32) + 1.0) * inv     # (0, 1]  -> log never sees 0
    u2 = lo.astype(jnp.float32) * inv             # [0, 1)

    # Box-Muller, with `scale` folded under the sqrt (one less VPU multiply).
    r = jnp.sqrt(jnp.float32(-2.0 * scale * scale) * jnp.log(u1))
    noise = r * jnp.cos(jnp.float32(_TWO_PI) * u2)

    # Native dtype in HBM, f32 math in registers, cast back on store.
    o_ref[...] = (x_ref[...].astype(jnp.float32) + noise).astype(o_ref.dtype)


def add_noise(x, seed, *, scale=0.01, block_rows=2048):
    """Pallas TPU implementation of Noise.forward: x + N(0, scale^2) noise."""
    orig_shape, dtype = x.shape, x.dtype
    n = x.size

    # Lane-dense layout: flatten (free reshape of a contiguous array) into
    # (rows, 128) with rows a multiple of 8 sublanes.  Padding only happens
    # when n is not a multiple of 8*128, and only to that small granularity;
    # uneven division by the row tile is handled by Pallas masked partial
    # blocks, not by padding.
    rows = pl.cdiv(n, LANES)
    rows8 = 8 * pl.cdiv(rows, 8)
    padded_n = rows8 * LANES

    flat = x.reshape(-1)
    if padded_n != n:
        flat = jnp.pad(flat, (0, padded_n - n))
    x2d = flat.reshape(rows8, LANES)

    # ~1 MiB (f32) row tile; keep >= 2 grid steps when possible so the
    # "parallel" axis can be split across v7x's two TensorCores.
    br = min(block_rows, rows8)
    if rows8 >= 16:
        br = min(br, 8 * pl.cdiv(pl.cdiv(rows8, 2), 8))
    grid = (pl.cdiv(rows8, br),)

    seed_arr = jnp.asarray([seed], dtype=jnp.int32)
    itemsize = jnp.dtype(dtype).itemsize

    out = pl.pallas_call(
        functools.partial(_noise_kernel, scale=float(scale)),
        out_shape=jax.ShapeDtypeStruct((rows8, LANES), dtype),
        grid_spec=pltpu.PrefetchScalarGridSpec(
            num_scalar_prefetch=1,
            grid=grid,
            in_specs=[pl.BlockSpec((br, LANES), lambda i, s: (i, 0))],
            out_specs=pl.BlockSpec((br, LANES), lambda i, s: (i, 0)),
        ),
        compiler_params=pltpu.CompilerParams(
            dimension_semantics=("parallel",)),
        cost_estimate=pl.CostEstimate(
            flops=30 * padded_n,
            transcendentals=3 * padded_n,
            bytes_accessed=2 * padded_n * itemsize),
        # NOTE: when the caller donates x, adding input_output_aliases={1: 0}
        # writes the result straight into x's HBM buffer; omitted here because
        # the demo below still reads x afterwards (would force a copy).
    )(seed_arr, x2d)

    out = out.reshape(-1)
    if padded_n != n:
        out = out[:n]
    return out.reshape(orig_shape)


if __name__ == "__main__":
    key = jax.random.PRNGKey(0)
    x = jax.random.normal(key, (2, 4, 16, 16), jnp.float32)

    scale = 0.01
    out = jax.block_until_ready(add_noise(x, seed=42, scale=scale))

    assert out.shape == x.shape and out.dtype == x.dtype

    diff = out - x
    d_std = float(jnp.std(diff))
    d_max = float(jnp.max(jnp.abs(diff)))
    # Noise must be non-degenerate, ~N(0, scale^2), and small in magnitude.
    assert d_std > 0.0, "no noise was added"
    assert 0.007 < d_std < 0.013, f"noise std off: {d_std}"
    # 16-bit u1 bounds |noise| by scale*sqrt(2*ln(65536)) ~= 0.047.
    assert d_max < 0.1, f"noise magnitude off: {d_max}"

    print("KERNEL_OK")
</pallas_src>

<mosaic_0001>
module attributes {stable_mosaic.version = 11 : i64} {
  func.func @_noise_kernel(%arg0: i32, %arg1: memref<1xi32, #tpu.memory_space<smem>>, %arg2: memref<8x128xf32, #tpu.memory_space<vmem>>, %arg3: memref<8x128xf32, #tpu.memory_space<vmem>>) attributes {dimension_semantics = [#tpu.dimension_semantics<parallel>], iteration_bounds = array<i64: 2>, scalar_prefetch = 1 : i64, scratch_operands = 0 : i64, tpu.core_type = #tpu.core_type<tc>, window_params = [{transform_indices = @transform_0, window_bounds = array<i64: 8, 128>}, {transform_indices = @transform_1, window_bounds = array<i64: 8, 128>}]} {
    %0 = tpu.iota {dimensions = array<i32: 0>} : vector<8x128xi32>
    %1 = tpu.iota {dimensions = array<i32: 1>} : vector<8x128xi32>
    %c8_i32 = arith.constant 8 : i32
    %2 = arith.muli %arg0, %c8_i32 : i32
    %3 = vector.broadcast %2 : i32 to vector<8x128xi32>
    %4 = arith.addi %3, %0 : vector<8x128xi32>
    %c128_i32 = arith.constant 128 : i32
    %5 = vector.broadcast %c128_i32 : i32 to vector<8x128xi32>
    %6 = arith.muli %4, %5 : vector<8x128xi32>
    %7 = arith.addi %6, %1 : vector<8x128xi32>
    %c-1640531527_i32 = arith.constant -1640531527 : i32
    %8 = vector.broadcast %c-1640531527_i32 : i32 to vector<8x128xi32>
    %9 = arith.muli %7, %8 : vector<8x128xi32>
    %c0 = arith.constant 0 : index
    %10 = memref.load %arg1[%c0] : memref<1xi32, #tpu.memory_space<smem>>
    %11 = vector.broadcast %10 : i32 to vector<8x128xi32>
    %12 = arith.addi %9, %11 : vector<8x128xi32>
    %c16_i32 = arith.constant 16 : i32
    %13 = vector.broadcast %c16_i32 : i32 to vector<8x128xi32>
    %14 = arith.shrsi %12, %13 : vector<8x128xi32>
    %c65535_i32 = arith.constant 65535 : i32
    %15 = vector.broadcast %c65535_i32 : i32 to vector<8x128xi32>
    %16 = arith.andi %14, %15 : vector<8x128xi32>
    %17 = arith.xori %12, %16 : vector<8x128xi32>
    %c-2048144789_i32 = arith.constant -2048144789 : i32
    %18 = vector.broadcast %c-2048144789_i32 : i32 to vector<8x128xi32>
    %19 = arith.muli %17, %18 : vector<8x128xi32>
    %c13_i32 = arith.constant 13 : i32
    %20 = vector.broadcast %c13_i32 : i32 to vector<8x128xi32>
    %21 = arith.shrsi %19, %20 : vector<8x128xi32>
    %c524287_i32 = arith.constant 524287 : i32
    %22 = vector.broadcast %c524287_i32 : i32 to vector<8x128xi32>
    %23 = arith.andi %21, %22 : vector<8x128xi32>
    %24 = arith.xori %19, %23 : vector<8x128xi32>
    %c-1028477387_i32 = arith.constant -1028477387 : i32
    %25 = vector.broadcast %c-1028477387_i32 : i32 to vector<8x128xi32>
    %26 = arith.muli %24, %25 : vector<8x128xi32>
    %c16_i32_0 = arith.constant 16 : i32
    %27 = vector.broadcast %c16_i32_0 : i32 to vector<8x128xi32>
    %28 = arith.shrsi %26, %27 : vector<8x128xi32>
    %c65535_i32_1 = arith.constant 65535 : i32
    %29 = vector.broadcast %c65535_i32_1 : i32 to vector<8x128xi32>
    %30 = arith.andi %28, %29 : vector<8x128xi32>
    %31 = arith.xori %26, %30 : vector<8x128xi32>
    %c16_i32_2 = arith.constant 16 : i32
    %32 = vector.broadcast %c16_i32_2 : i32 to vector<8x128xi32>
    %33 = arith.shrsi %31, %32 : vector<8x128xi32>
    %c65535_i32_3 = arith.constant 65535 : i32
    %34 = vector.broadcast %c65535_i32_3 : i32 to vector<8x128xi32>
    %35 = arith.andi %33, %34 : vector<8x128xi32>
    %c65535_i32_4 = arith.constant 65535 : i32
    %36 = vector.broadcast %c65535_i32_4 : i32 to vector<8x128xi32>
    %37 = arith.andi %31, %36 : vector<8x128xi32>
    %38 = arith.sitofp %35 : vector<8x128xi32> to vector<8x128xf32>
    %cst = arith.constant 1.000000e+00 : f32
    %39 = vector.broadcast %cst : f32 to vector<8x128xf32>
    %40 = arith.addf %38, %39 : vector<8x128xf32>
    %cst_5 = arith.constant 1.52587891E-5 : f32
    %41 = vector.broadcast %cst_5 : f32 to vector<8x128xf32>
    %42 = arith.mulf %40, %41 : vector<8x128xf32>
    %43 = arith.sitofp %37 : vector<8x128xi32> to vector<8x128xf32>
    %cst_6 = arith.constant 1.52587891E-5 : f32
    %44 = vector.broadcast %cst_6 : f32 to vector<8x128xf32>
    %45 = arith.mulf %43, %44 : vector<8x128xf32>
    %46 = math.log %42 : vector<8x128xf32>
    %cst_7 = arith.constant -2.000000e-04 : f32
    %47 = vector.broadcast %cst_7 : f32 to vector<8x128xf32>
    %48 = arith.mulf %47, %46 : vector<8x128xf32>
    %49 = math.sqrt %48 : vector<8x128xf32>
    %cst_8 = arith.constant 6.28318548 : f32
    %50 = vector.broadcast %cst_8 : f32 to vector<8x128xf32>
    %51 = arith.mulf %50, %45 : vector<8x128xf32>
    %52 = math.cos %51 : vector<8x128xf32>
    %53 = arith.mulf %49, %52 : vector<8x128xf32>
    %c0_9 = arith.constant 0 : index
    %c0_10 = arith.constant 0 : index
    %54 = vector.load %arg2[%c0_9, %c0_10] : memref<8x128xf32, #tpu.memory_space<vmem>>, vector<8x128xf32>
    %55 = arith.addf %54, %53 : vector<8x128xf32>
    %c0_11 = arith.constant 0 : index
    %c0_12 = arith.constant 0 : index
    %56 = vector.load %arg3[%c0_11, %c0_12] : memref<8x128xf32, #tpu.memory_space<vmem>>, vector<8x128xf32>
    tpu.vector_store %arg3[%c0_11, %c0_12], %55 {strides = array<i32>} : memref<8x128xf32, #tpu.memory_space<vmem>>, vector<8x128xf32>,
    return
  }
  func.func @transform_0(%arg0: i32, %arg1: memref<1xi32, #tpu.memory_space<smem>>) -> (i32, i32) {
    %c0_i32 = arith.constant 0 : i32
    %c0_i32_0 = arith.constant 0 : i32
    return %arg0, %c0_i32 : i32, i32
  }
  func.func @transform_1(%arg0: i32, %arg1: memref<1xi32, #tpu.memory_space<smem>>) -> (i32, i32) {
    %c0_i32 = arith.constant 0 : i32
    %c0_i32_0 = arith.constant 0 : i32
    return %arg0, %c0_i32 : i32, i32
  }
}

</mosaic_0001>

<llo_original>
// kernel: tpu_custom_call.1
$region0: #{tpu_custom_call.1}
  #allocation0 [shape = 'u32[]', space=smem, size = 0x4, offset = 0x4, fixed_abs, tag = 'smem constant byte address 0x4 - core index']
  #allocation1 [shape = 'u32[144,128]{1,0:T(1,128)}', space=vmem, size = 0x12000, scoped, tag = 'internal scratch']
  #allocation2 [shape = 's32[1]{0}', space=sflag, size = 0x4, scoped, tag = 'scoped memory for tpu_custom_call.1']
  #allocation3 [shape = 's32[1]{0:T(128)S(6)}', space=smem, size = 0x200, scoped, tag = 'prefetched SMEM operand 0']
  %s0 = inlined_call_operand.<no memory space> [shape: s32[1], index: 0, kind: input, shape index: {}]
  %s1 = inlined_call_operand.hbm [shape: f32[16,128], index: 1, kind: input, shape index: {}]
  %s2 = inlined_call_operand.hbm [shape: f32[16,128], index: 2, kind: output, shape index: {}]
  %s3 = sld [smem:[#allocation0]]
  $region41: #{tpu_custom_call.1} parent=0
    _
  %s5 = ssub.s32 1, %s3
  %s6 = scalar_select 0, %s5, %s3
  %7 = sst [smem:[#allocation3]] %s0
  $region1: #{tpu_custom_call.1} parent=0
    #allocation4 [shape = 'u8[8192]{0}', space=vmem, size = 0x2000, scoped, tag = 'input window, operand 1']
    #allocation5 [shape = 's32[2]{0}', space=sflag, size = 0x8, scoped, tag = 'scoped memory for tpu_custom_call.1']
    #allocation6 [shape = 's32[2]{0}', space=sflag, size = 0x8, scoped, tag = 'scoped memory for tpu_custom_call.1']
    #allocation7 [shape = 'u8[8192]{0}', space=vmem, size = 0x2000, scoped, tag = 'output window, operand 0']
    %8 = vsyncpa [#allocation5], 0
    %s9 = scalar_lea.sflag [#allocation5], 1
    %10 = vsyncpa %s9, 0
    %11 = vsyncpa [#allocation6], 0
    %s12 = scalar_lea.sflag [#allocation6], 1
    %13 = vsyncpa %s12, 0
    loop: start=0, step=1, limit=4
    $region2: #{tpu_custom_call.1} parent=1 // loop_pre_header
      _
    $region3: #{tpu_custom_call.1} parent=1 // loop_header
      %s15 = sphi 0, %s19
      %p16 = scmp.ge.s32.totalorder %s15, 4
      %s25 = sphi 0, %s27
      %s28 = sphi 0, %s25
      %s29 = sphi 0, %s28
      %s45 = sphi 0, %s29
      %s51 = sphi 0, %s53
      %s54 = sphi 0, %s51
      %s55 = sphi 0, %s54
      %s71 = sphi 0, %s55
    $region4: #{tpu_custom_call.1} parent=1 // loop_header_branch
      %18 = sbr.rel (%p16) target = $region8
    $region5: #{tpu_custom_call.1} parent=1 // loop_body
      %s20 = ssub.s32 %s15, 1
      %s21 = ssub.s32 %s15, 2
      %s22 = sadd.s32 %s15, 1
      %s23 = ssub.s32 %s15, %s22
      %p24 = scmp.eq.s32.totalorder %s23, 0
      %s26 = sadd.s32 %s25, 1
      %s27 = scalar_select %p24, %s25, %s26
      %p30 = pneg %p24
      %p31 = scmp.eq.s32.totalorder %s15, 1
      %p32 = por %p30, %p31
      %p33 = scmp.ne.s32.totalorder %s25, %s28
      %p34 = scmp.eq.s32.totalorder %s15, 0
      %p35 = por %p33, %p34
      %p36 = scmp.ne.s32.totalorder %s25, %s28
      %p37 = scmp.eq.s32.totalorder %s20, 1
      %p38 = por %p36, %p37
      %p39 = scmp.ne.s32.totalorder %s28, %s29
      %p40 = scmp.eq.s32.totalorder %s20, 0
      %p41 = por %p39, %p40
      %p42 = scmp.ne.s32.totalorder %s28, %s29
      %p43 = scmp.eq.s32.totalorder %s21, 1
      %p44 = por %p42, %p43
      %p46 = scmp.ne.s32.totalorder %s29, %s45
      %p47 = scmp.eq.s32.totalorder %s21, 0
      %p48 = por %p46, %p47
      %s49 = ssub.s32 %s15, %s22
      %p50 = scmp.eq.s32.totalorder %s49, 0
      %s52 = sadd.s32 %s51, 1
      %s53 = scalar_select %p50, %s51, %s52
      %p56 = pneg %p50
      %p57 = scmp.eq.s32.totalorder %s15, 1
      %p58 = por %p56, %p57
      %p59 = scmp.ne.s32.totalorder %s51, %s54
      %p60 = scmp.eq.s32.totalorder %s15, 0
      %p61 = por %p59, %p60
      %p62 = scmp.ne.s32.totalorder %s51, %s54
      %p63 = scmp.eq.s32.totalorder %s20, 1
      %p64 = por %p62, %p63
      %p65 = scmp.ne.s32.totalorder %s54, %s55
      %p66 = scmp.eq.s32.totalorder %s20, 0
      %p67 = por %p65, %p66
      %p68 = scmp.ne.s32.totalorder %s54, %s55
      %p69 = scmp.eq.s32.totalorder %s21, 1
      %p70 = por %p68, %p69
      %p72 = scmp.ne.s32.totalorder %s55, %s71
      %p73 = scmp.eq.s32.totalorder %s21, 0
      %p74 = por %p72, %p73
      %p75 = scmp.le.s32.totalorder 1, %s15
      %p76 = scmp.lt.s32.totalorder %s15, 3
      %p77 = pnand %p75, %p76
      %p78 = pneg %p77
      // Predicated region
      $region9: #{tpu_custom_call.1} parent=5 // pred_check
        _
      $region10: #{tpu_custom_call.1} parent=5 // pred_check_branch
        %80 = sbr.rel (%p77) target = $region12
      $region11: #{tpu_custom_call.1} parent=5 // pred_region
        %s81 = ssub.s32 %s15, 1
      $region12: #{tpu_custom_call.1} parent=5 // pred_fallthru
        _
      %p82 = scmp.lt.s32.totalorder %s15, 2
      // Predicated region
      $region13: #{tpu_custom_call.1} parent=5 // pred_check
        %p83 = pneg %p82
      $region14: #{tpu_custom_call.1} parent=5 // pred_check_branch
        %85 = sbr.rel (%p83) target = $region16
      $region15: #{tpu_custom_call.1} parent=5 // pred_region
        // Predicated region
        $region17: #{tpu_custom_call.1} parent=15 // pred_check
          %p86 = pneg %p35
        $region18: #{tpu_custom_call.1} parent=15 // pred_check_branch
          %88 = sbr.rel (%p86) target = $region20
        $region19: #{tpu_custom_call.1} parent=15 // pred_region
          %s89 = sand.u32 %s25, 1
          %s90 = scalar_lea.sflag [#allocation5], %s89
          %s91 = sand.u32 %s25, 1
          %s92 = smul.addr %s91, 8
          %s93 = scalar_lea.vmem [#allocation4], %s92
          %s95 = ssub.s32 128, 128
          %96 = vsyncadd %s90, %s95
          %s97 = smul.addr %s15, 128
          %s98 = scalar_lea.hbm %s1, %s97
          %s100 = sshll.u32 %s93, 4
          %s101 = int_to_ptr.vmem [resolvable:$true] %s100
          %103 = dma.hbm_to_vmem [thread:$0]  %s98, 128, %s101, %s90
        $region20: #{tpu_custom_call.1} parent=15 // pred_fallthru
          _
      $region16: #{tpu_custom_call.1} parent=5 // pred_fallthru
        _
      %p104 = scmp.le.s32.totalorder 1, %s15
      %p105 = scmp.lt.s32.totalorder %s15, 3
      %p106 = pnand %p104, %p105
      %p107 = pneg %p106
      // Predicated region
      $region21: #{tpu_custom_call.1} parent=5 // pred_check
        _
      $region22: #{tpu_custom_call.1} parent=5 // pred_check_branch
        %109 = sbr.rel (%p106) target = $region24
      $region23: #{tpu_custom_call.1} parent=5 // pred_region
        %s110 = ssub.s32 %s15, 1
        %s111 = sand.u32 %s28, 1
        %s112 = scalar_lea.sflag [#allocation5], %s111
        %s113 = sand.u32 %s28, 1
        %s114 = smul.addr %s113, 8
        %s115 = scalar_lea.vmem [#allocation4], %s114
        // Predicated region
        $region25: #{tpu_custom_call.1} parent=23 // pred_check
          %p116 = pneg %p41
        $region26: #{tpu_custom_call.1} parent=23 // pred_check_branch
          %118 = sbr.rel (%p116) target = $region28
        $region27: #{tpu_custom_call.1} parent=23 // pred_region
          %119 = dma.done %s112, 128
        $region28: #{tpu_custom_call.1} parent=23 // pred_fallthru
          _
        %s120 = sand.u32 %s28, 1
        %s121 = scalar_lea.sflag [#allocation5], %s120
        %s122 = sand.u32 %s28, 1
        %s123 = smul.addr %s122, 8
        %s124 = scalar_lea.vmem [#allocation4], %s123
        %p125 = pneg %p41
        %p126 = pneg %p38
        %p127 = pneg %p67
        %p128 = pneg %p64
        %s129 = sand.u32 %s54, 1
        %s130 = scalar_lea.sflag [#allocation6], %s129
        %s131 = sand.u32 %s54, 1
        %s132 = smul.addr %s131, 8
        %s133 = scalar_lea.vmem [#allocation7], %s132
        %v134 = vlaneseq
        %v135 = vshrl.u32 %v134, 7
        %v136 = vlaneseq
        %v137 = vand.u32 %v136, 127
        %s138 = smul.u32 %s20, 8
        %v139 = vstv %s138
        %v140 = vadd.s32 %v139, %v135
        %v141 = vmul.u32 %v140, 128
        %v142 = vadd.s32 %v141, %v137
        %v143 = vmul.u32 %v142, 2654435769
        %s144 = sld [smem:[#allocation3]]
        %v145 = vstv %s144
        %v146 = vadd.s32 %v143, %v145
        %v147 = vshra.s32 %v146, 16
        %v148 = vand.u32 %v147, 65535
        %v149 = vxor.u32 %v146, %v148
        %v150 = vmul.u32 %v149, 2246822507
        %v151 = vshra.s32 %v150, 13
        %v152 = vand.u32 %v151, 524287
        %v153 = vxor.u32 %v150, %v152
        %v154 = vmul.u32 %v153, 3266489909
        %v155 = vshra.s32 %v154, 16
        %v156 = vand.u32 %v155, 65535
        %v157 = vxor.u32 %v154, %v156
        %v158 = vshra.s32 %v157, 16
        %v159 = vand.u32 %v158, 65535
        %v160 = vand.u32 %v157, 65535
        %v161 = vcvt.s32.f32 %v159
        %v162 = vadd.f32 %v161, 1.0
        %v163 = vmul.f32 %v162, 1.5258789e-05
        %v164 = vcvt.s32.f32 %v160
        %v165 = vmul.f32 %v164, 1.5258789e-05
        %v166 = vlog2.pop %v163
        %v167 = vmul.f32 %v166, 0.6931472
        %v168 = vmul.f32 %v167, -0.0002
        %v169 = vrsqrt.pop %v168
        %v170 = vmul.f32 %v168, %v169
        %vm171 = vcmp.eq.f32.partialorder %v168, inf
        %v172 = vsel %vm171, %v168, %v170
        %vm173 = vcmp.eq.f32.partialorder %v168, 0.0
        %v174 = vand.u32 %v168, 2147483648
        %v175 = vsel %vm173, %v174, %v172
        %v176 = vmul.f32 %v165, 6.2831855
        %v177 = vand.u32 2147483647, %v176
        %vm178 = vcmp.le.f32.partialorder %v177, 0.7853982
        %vm179 = vcmp.lt.s32.totalorder %v176, 0
        %v180 = vand.u32 %v176, 2139095040
        %v181 = vshrl.u32 %v180, 23
        %v182 = vsub.s32 %v181, 127
        %v183 = vand.u32 2147483647, %v176
        %v184 = vand.u32 %v183, 8388607
        %v185 = vor.u32 %v184, 8388608
        %v186 = vsub.s32 0, %v185
        %v187 = vadd.s32 %v182, 1
        %vm188 = vcmp.gt.s32.totalorder %v187, 0
        %v189 = vsel %vm188, %v187, 0
        %v190 = vshrl.u32 %v189, 5
        %v191 = vand.u32 %v189, 31
        %v192 = vsub.s32 32, %v191
        %v193 = vshrl.u32 683565275, %v192
        %v194 = vshll.u32 683565275, %v191
        %v195 = vshrl.u32 2475754826, %v192
        %v196 = vor.u32 %v194, %v195
        %v197 = vshll.u32 2475754826, %v191
        %v198 = vshrl.u32 2131351028, %v192
        %v199 = vor.u32 %v197, %v198
        %v200 = vshll.u32 2131351028, %v191
        %v201 = vshrl.u32 2102212464, %v192
        %v202 = vor.u32 %v200, %v201
        %v203 = vshll.u32 2102212464, %v191
        %v204 = vshrl.u32 920167782, %v192
        %v205 = vor.u32 %v203, %v204
        %v206 = vshll.u32 920167782, %v191
        %v207 = vshrl.u32 1326507024, %v192
        %v208 = vor.u32 %v206, %v207
        %vm209 = vcmp.lt.s32.totalorder %v190, 1
        %vm210 = vcmp.lt.s32.totalorder %v190, 2
        %vm211 = vcmp.lt.s32.totalorder %v190, 3
        %vm212 = vcmp.lt.s32.totalorder %v190, 4
        %v213 = vsel %vm209, %v193, %v196
        %v214 = vsel %vm212, %v202, 2102212464
        %v215 = vsel %vm211, %v199, %v214
        %v216 = vsel %vm210, %v213, %v215
        %v217 = vsel %vm209, %v196, %v199
        %v218 = vsel %vm212, %v205, 920167782
        %v219 = vsel %vm211, %v202, %v218
        %v220 = vsel %vm210, %v217, %v219
        %v221 = vsel %vm209, %v199, %v202
        %v222 = vsel %vm212, %v208, 1326507024
        %v223 = vsel %vm211, %v205, %v222
        %v224 = vsel %vm210, %v221, %v223
        %v225 = vshll.u32 %v185, 8
        %v226 = vmul.u32.u64.compose %v225, %v224
        %v227 = vextract.low.u32 %v226
        %v228 = vextract.high.u32 %v226
        %v229 = vmul.u32.u64.compose %v225, %v220
        %v230 = vextract.low.u32 %v229
        %v231 = vextract.high.u32 %v229
        %v232 = vmul.u32 %v225, %v216
        %v233 = vadd.s32 %v228, %v230
        %vm234 = vc.u32 %v228, %v230
        %v235 = vadd.s32 %v231, 1
        %v236 = vsel %vm234, %v235, %v231
        %v237 = vadd.s32 %v232, %v236
        %v238 = vadd.s32 %v237, 536870912
        %v239 = vshrl.u32 %v238, 30
        %v240 = vshll.u32 %v239, 30
        %v241 = vsub.s32 %v237, %v240
        %vm242 = vcmp.lt.s32.totalorder %v241, 0
        %v243 = vsub.s32 0, %v241
        %v244 = vsel %vm242, %v243, %v241
        %v245 = vclz %v244
        %v246 = vsub.s32 %v245, 2
        %vm247 = vcmp.gt.s32.totalorder 0, %v246
        %v248 = vsel %vm247, 0, %v246
        %v249 = vsub.s32 32, %v248
        %v250 = vshll.u32 %v241, %v248
        %v251 = vshrl.u32 %v233, %v249
        %v252 = vor.u32 %v250, %v251
        %v253 = vsub.s32 4294967266, %v248
        %v254 = vadd.s32 %v253, 127
        %v255 = vshll.u32 %v254, 23
        %v256 = vor.u32 4788187, %v255
        %v257 = vand.u32 2147483647, %v256
        %v259 = vcvt.s32.f32 %v252
        %v260 = vmul.f32 %v259, %v257
        %v261 = vxor.u32 %v260, 2147483648
        %v262 = vsel %vm179, %v261, %v260
        %v263 = vsub.s32 4, %v239
        %v264 = vsel %vm179, %v263, %v239
        %v265 = vsel %vm178, %v176, %v262
        %v266 = vsel %vm178, 0, %v264
        %v267 = vcosq.f32.pop %v265
        %v268 = vsinq.f32.pop %v265
        %vm269 = vweird.f32 %v176
        %v270 = vand.u32 %v266, 3
        %vm271 = vcmp.lt.s32.totalorder %v270, 2
        %vm272 = vcmp.eq.s32.totalorder %v270, 0
        %v273 = vxor.u32 %v268, 2147483648
        %v274 = vsel %vm272, %v267, %v273
        %vm275 = vcmp.eq.s32.totalorder %v270, 2
        %v276 = vxor.u32 %v267, 2147483648
        %v277 = vsel %vm275, %v276, %v268
        %v278 = vsel %vm271, %v274, %v277
        %v279 = vsel %vm269, nan, %v278
        %v280 = vmul.f32 %v175, %v279
        %v281 = vld [vmem:[%s115] sm:$0xff]
        %v282 = vadd.f32 %v281, %v280
        %283 = vst [vmem:[%s133] sm:$0xff] %v282
        %s284 = sand.u32 %s54, 1
        %s285 = scalar_lea.sflag [#allocation6], %s284
        %s286 = sand.u32 %s54, 1
        %s287 = smul.addr %s286, 8
        %s288 = scalar_lea.vmem [#allocation7], %s287
        // Predicated region
        $region29: #{tpu_custom_call.1} parent=23 // pred_check
          %p289 = pneg %p64
        $region30: #{tpu_custom_call.1} parent=23 // pred_check_branch
          %291 = sbr.rel (%p289) target = $region32
        $region31: #{tpu_custom_call.1} parent=23 // pred_region
          %s293 = ssub.s32 128, 128
          %294 = vsyncadd %s285, %s293
          %s295 = smul.addr %s20, 128
          %s296 = scalar_lea.hbm %s2, %s295
          %s298 = sshll.u32 %s288, 4
          %s299 = int_to_ptr.vmem [resolvable:$true] %s298
          %301 = dma.vmem_to_hbm [thread:$0]  %s299, 128, %s296, %s285
        $region32: #{tpu_custom_call.1} parent=23 // pred_fallthru
          _
      $region24: #{tpu_custom_call.1} parent=5 // pred_fallthru
        _
      %p302 = scmp.le.s32.totalorder 2, %s15
      // Predicated region
      $region33: #{tpu_custom_call.1} parent=5 // pred_check
        %p303 = pneg %p302
      $region34: #{tpu_custom_call.1} parent=5 // pred_check_branch
        %305 = sbr.rel (%p303) target = $region36
      $region35: #{tpu_custom_call.1} parent=5 // pred_region
        %s306 = ssub.s32 %s15, 2
        // Predicated region
        $region37: #{tpu_custom_call.1} parent=35 // pred_check
          %p307 = pneg %p70
        $region38: #{tpu_custom_call.1} parent=35 // pred_check_branch
          %309 = sbr.rel (%p307) target = $region40
        $region39: #{tpu_custom_call.1} parent=35 // pred_region
          %s310 = sand.u32 %s55, 1
          %s311 = scalar_lea.sflag [#allocation6], %s310
          %s312 = sand.u32 %s55, 1
          %s313 = smul.addr %s312, 8
          %s314 = scalar_lea.vmem [#allocation7], %s313
          %315 = dma.done %s311, 128
        $region40: #{tpu_custom_call.1} parent=35 // pred_fallthru
          _
      $region36: #{tpu_custom_call.1} parent=5 // pred_fallthru
        _
    $region6: #{tpu_custom_call.1} parent=1 // loop_footer
      %s19 = sadd.s32 1, %s15
    $region7: #{tpu_custom_call.1} parent=1 // loop_footer_branch
      %14 = sbr.rel target = $region3
    $region8: #{tpu_custom_call.1} parent=1 // loop_exit
      _
    %316 = vsyncpa [#allocation5], 1
    %s317 = scalar_lea.sflag [#allocation5], 1
    %318 = vsyncpa %s317, 1
    %319 = vsyncpa [#allocation6], 1
    %s320 = scalar_lea.sflag [#allocation6], 1
    %321 = vsyncpa %s320, 1

</llo_original>
